<compile_context>
chip_gen: v6e
topology: v6e:2x2x1
jax: 0.10.0
libtpu: 0.0.40
codegen_flags: <defaults>
</compile_context>

<pallas_src>
import functools

import jax
import jax.numpy as jnp
from jax import lax
from jax.experimental import pallas as pl
from jax.experimental.pallas import tpu as pltpu


def _round_up(x, m):
    return ((x + m - 1) // m) * m


def _loss_kernel(ysest_ref, ystrue_ref, logits_ref, actions_ref,
                 per_act_rew_ref, add_rew_ref,
                 mod_out_ref, rout_out_ref):
    # Block layout: batch on the lane axis (TB lanes); D / T / A are sublane / outer dims.
    i = pl.program_id(1)                      # batch-tile (reduction) axis
    D, TB = ysest_ref.shape
    T, A, _ = logits_ref.shape

    # --- 1. module losses: element-wise MSE (reduce=False) summed over dim 1 ---
    diff = ysest_ref[...].astype(jnp.float32) - ystrue_ref[...].astype(jnp.float32)
    per_sample_loss = jnp.sum(diff * diff, axis=0, keepdims=True)            # (1, TB)

    # --- 2. per-sample final reward (NegLossReward) ---
    final_reward = -per_sample_loss                                          # (1, TB)

    # --- 3. per-step rewards + suffix-sum returns (discounting == 1.0) ---
    rewards = (per_act_rew_ref[...].astype(jnp.float32) * (1.0 / float(T))
               + add_rew_ref[...].astype(jnp.float32))                       # (T, TB)
    # returns[t] = sum_{t' >= t} rewards[t'] as a single small MXU matmul.
    row = lax.broadcasted_iota(jnp.int32, (T, T), 0)
    col = lax.broadcasted_iota(jnp.int32, (T, T), 1)
    suffix_m = (col >= row).astype(jnp.float32)                              # (T, T)
    # final_reward (added to rewards[T-1] in the original) appears in every suffix sum,
    # so it is broadcast-added after the matmul.
    returns = (jnp.dot(suffix_m, rewards,
                       preferred_element_type=jnp.float32,
                       precision=lax.Precision.HIGHEST)
               + final_reward)                                               # (T, TB)

    # --- 4. decision-making loss (REINFORCE): sum_t -log pi(a_t|s_t) * return_t ---
    logits = logits_ref[...].astype(jnp.float32)                             # (T, A, TB)
    m = jnp.max(logits, axis=1, keepdims=True)
    shifted = logits - m                                                     # (T, A, TB)
    lse = jnp.log(jnp.sum(jnp.exp(shifted), axis=1))                         # (T, TB)
    act_iota = lax.broadcasted_iota(jnp.int32, (T, A, TB), 1)
    sel = act_iota == actions_ref[...][:, None, :]
    # gather the selected (shifted) logit without materializing a full log-softmax tensor
    logit_a = jnp.sum(jnp.where(sel, shifted, 0.0), axis=1)                  # (T, TB)
    logp_a = logit_a - lse                                                   # (T, TB)
    routing = jnp.sum(-logp_a * returns, axis=0, keepdims=True)              # (1, TB)

    # --- lane-dense partial-sum accumulation into the resident output blocks (P3) ---
    @pl.when(i == 0)
    def _():
        mod_out_ref[...] = jnp.zeros_like(mod_out_ref)
        rout_out_ref[...] = jnp.zeros_like(rout_out_ref)

    mod_out_ref[...] += per_sample_loss[None]                                # (1, 1, TB)
    rout_out_ref[...] += routing[None]                                       # (1, 1, TB)


@functools.partial(jax.jit, static_argnames=("batch_tile", "core_splits"))
def routing_loss_forward(ysest, ystrue, logits, actions, per_act_rew, add_rew,
                         *, batch_tile=512, core_splits=2):
    B, D = ysest.shape
    _, T, A = logits.shape
    assert batch_tile % 128 == 0

    # Batch tile on the lane axis (multiple of 128); shrink for small batches.
    TB = min(batch_tile, _round_up(B, 128))
    tiles = pl.cdiv(B, TB)
    NC = core_splits if tiles >= core_splits else 1       # per-core partial sums (v7x megacore)
    tiles = _round_up(tiles, NC)
    tiles_per_core = tiles // NC
    B_pad = tiles * TB
    pad = B_pad - B

    # Layout plumbing: put the (large) batch axis last (lanes), zero-pad it.
    # Zero padding contributes exactly 0 to both loss sums.
    def pad_last(x):
        return jnp.pad(x, [(0, 0)] * (x.ndim - 1) + [(0, pad)])

    ysest_t = pad_last(ysest.T)                                  # (D, B_pad)
    ystrue_t = pad_last(ystrue.T)                                # (D, B_pad)
    logits_t = pad_last(jnp.transpose(logits, (1, 2, 0)))        # (T, A, B_pad)
    actions_t = pad_last(actions.T)                              # (T, B_pad)
    par_t = pad_last(per_act_rew.T)                              # (T, B_pad)
    add_t = pad_last(add_rew.T)                                  # (T, B_pad)

    def map2(c, i):
        return (0, c * tiles_per_core + i)

    def map3(c, i):
        return (0, 0, c * tiles_per_core + i)

    out_map = lambda c, i: (c, 0, 0)

    mod_partials, rout_partials = pl.pallas_call(
        _loss_kernel,
        grid=(NC, tiles_per_core),
        in_specs=[
            pl.BlockSpec((D, TB), map2),
            pl.BlockSpec((D, TB), map2),
            pl.BlockSpec((T, A, TB), map3),
            pl.BlockSpec((T, TB), map2),
            pl.BlockSpec((T, TB), map2),
            pl.BlockSpec((T, TB), map2),
        ],
        out_specs=(
            pl.BlockSpec((1, 1, TB), out_map),
            pl.BlockSpec((1, 1, TB), out_map),
        ),
        out_shape=(
            jax.ShapeDtypeStruct((NC, 1, TB), jnp.float32),
            jax.ShapeDtypeStruct((NC, 1, TB), jnp.float32),
        ),
        compiler_params=pltpu.CompilerParams(
            dimension_semantics=("parallel", "arbitrary"),
        ),
    )(ysest_t, ystrue_t, logits_t, actions_t, par_t, add_t)

    # reduce=True -> batch means over the TRUE batch size B.
    module_loss = jnp.sum(mod_partials) / B
    routing_loss = jnp.sum(rout_partials) / B
    return module_loss, routing_loss


def _reference(ysest, ystrue, logits, actions, per_act_rew, add_rew):
    T = logits.shape[1]
    per_sample = jnp.sum((ysest - ystrue) ** 2, axis=1)
    rew = per_act_rew / T + add_rew
    rew = rew.at[:, -1].add(-per_sample)
    rets = jnp.flip(jnp.cumsum(jnp.flip(rew, axis=1), axis=1), axis=1)
    logp = jax.nn.log_softmax(logits, axis=-1)
    logp_a = jnp.take_along_axis(logp, actions[:, :, None], axis=-1)[..., 0]
    return jnp.mean(per_sample), jnp.mean(jnp.sum(-logp_a * rets, axis=1))


if __name__ == "__main__":
    def run_case(key, B, D, T, A, **kw):
        k1, k2, k3, k4, k5, k6 = jax.random.split(key, 6)
        ysest = jax.random.normal(k1, (B, D), jnp.float32)
        ystrue = jax.random.normal(k2, (B, D), jnp.float32)
        logits = jax.random.normal(k3, (B, T, A), jnp.float32)      # decision policies
        actions = jax.random.randint(k4, (B, T), 0, A, jnp.int32)   # taken actions
        per_act_rew = 0.05 * jax.random.normal(k5, (B, T), jnp.float32)
        add_rew = 0.1 * jax.random.normal(k6, (B, T), jnp.float32)

        mod_l, rout_l = routing_loss_forward(ysest, ystrue, logits, actions,
                                             per_act_rew, add_rew, **kw)
        jax.block_until_ready((mod_l, rout_l))

        mod_ref, rout_ref = _reference(ysest, ystrue, logits, actions,
                                       per_act_rew, add_rew)
        assert jnp.allclose(mod_l, mod_ref, rtol=1e-4, atol=1e-4), (mod_l, mod_ref)
        assert jnp.allclose(rout_l, rout_ref, rtol=1e-4, atol=1e-4), (rout_l, rout_ref)

    key = jax.random.PRNGKey(0)
    k_a, k_b = jax.random.split(key)
    # small single-tile case: grid (1, 1)
    run_case(k_a, B=8, D=32, T=4, A=16)
    # multi-tile + 2-way core-split case: grid (2, 2), ragged batch handled by zero padding
    run_case(k_b, B=300, D=32, T=4, A=16, batch_tile=128, core_splits=2)
    print("KERNEL_OK")
</pallas_src>

<mosaic_0001>
module attributes {stable_mosaic.version = 11 : i64} {
  func.func @_loss_kernel(%arg0: i32, %arg1: i32, %arg2: memref<32x128xf32, #tpu.memory_space<vmem>>, %arg3: memref<32x128xf32, #tpu.memory_space<vmem>>, %arg4: memref<4x16x128xf32, #tpu.memory_space<vmem>>, %arg5: memref<4x128xi32, #tpu.memory_space<vmem>>, %arg6: memref<4x128xf32, #tpu.memory_space<vmem>>, %arg7: memref<4x128xf32, #tpu.memory_space<vmem>>, %arg8: memref<1x1x128xf32, #tpu.memory_space<vmem>>, %arg9: memref<1x1x128xf32, #tpu.memory_space<vmem>>) attributes {dimension_semantics = [#tpu.dimension_semantics<parallel>, #tpu.dimension_semantics<arbitrary>], iteration_bounds = array<i64: 1, 1>, scalar_prefetch = 0 : i64, scratch_operands = 0 : i64, tpu.core_type = #tpu.core_type<tc>, window_params = [{transform_indices = @transform_0, window_bounds = array<i64: 32, 128>}, {transform_indices = @transform_1, window_bounds = array<i64: 32, 128>}, {transform_indices = @transform_2, window_bounds = array<i64: 4, 16, 128>}, {transform_indices = @transform_3, window_bounds = array<i64: 4, 128>}, {transform_indices = @transform_4, window_bounds = array<i64: 4, 128>}, {transform_indices = @transform_5, window_bounds = array<i64: 4, 128>}, {transform_indices = @transform_6, window_bounds = array<i64: 1, 1, 128>}, {transform_indices = @transform_7, window_bounds = array<i64: 1, 1, 128>}]} {
    %c0 = arith.constant 0 : index
    %c0_0 = arith.constant 0 : index
    %0 = vector.load %arg2[%c0, %c0_0] : memref<32x128xf32, #tpu.memory_space<vmem>>, vector<32x128xf32>
    %c0_1 = arith.constant 0 : index
    %c0_2 = arith.constant 0 : index
    %1 = vector.load %arg3[%c0_1, %c0_2] : memref<32x128xf32, #tpu.memory_space<vmem>>, vector<32x128xf32>
    %2 = arith.subf %0, %1 : vector<32x128xf32>
    %3 = arith.mulf %2, %2 : vector<32x128xf32>
    %cst = arith.constant dense<0.000000e+00> : vector<128xf32>
    %4 = vector.multi_reduction <add>, %3, %cst [0] : vector<32x128xf32> to vector<128xf32>
    %5 = vector.shape_cast %4 : vector<128xf32> to vector<1x128xf32>
    %cst_3 = arith.constant 0.000000e+00 : f32
    %6 = vector.broadcast %cst_3 : f32 to vector<1x128xf32>
    %7 = arith.subf %6, %5 : vector<1x128xf32>
    %c0_4 = arith.constant 0 : index
    %c0_5 = arith.constant 0 : index
    %8 = vector.load %arg6[%c0_4, %c0_5] : memref<4x128xf32, #tpu.memory_space<vmem>>, vector<4x128xf32>
    %cst_6 = arith.constant 2.500000e-01 : f32
    %9 = vector.broadcast %cst_6 : f32 to vector<4x128xf32>
    %10 = arith.mulf %8, %9 : vector<4x128xf32>
    %c0_7 = arith.constant 0 : index
    %c0_8 = arith.constant 0 : index
    %11 = vector.load %arg7[%c0_7, %c0_8] : memref<4x128xf32, #tpu.memory_space<vmem>>, vector<4x128xf32>
    %12 = arith.addf %10, %11 : vector<4x128xf32>
    %13 = tpu.iota {dimensions = array<i32: 0>} : vector<4x4xi32>
    %14 = tpu.iota {dimensions = array<i32: 1>} : vector<4x4xi32>
    %15 = arith.cmpi sge, %14, %13 : vector<4x4xi32>
    %16 = arith.extui %15 : vector<4x4xi1> to vector<4x4xi32>
    %17 = arith.sitofp %16 : vector<4x4xi32> to vector<4x4xf32>
    %cst_9 = arith.constant dense<0.000000e+00> : vector<4x128xf32>
    %18 = tpu.matmul %17, %12, %cst_9 {dimension_numbers = #tpu.dot_dimension_numbers<[1], [0], [0], [1], [0, 0, 1, 1], [], []>, precision = #tpu.contract_precision<fp32>} : vector<4x4xf32>, vector<4x128xf32>, vector<4x128xf32> -> vector<4x128xf32>
    %19 = vector.broadcast %7 : vector<1x128xf32> to vector<4x128xf32>
    %20 = arith.addf %18, %19 : vector<4x128xf32>
    %c0_10 = arith.constant 0 : index
    %c0_11 = arith.constant 0 : index
    %c0_12 = arith.constant 0 : index
    %21 = vector.load %arg4[%c0_10, %c0_11, %c0_12] : memref<4x16x128xf32, #tpu.memory_space<vmem>>, vector<4x16x128xf32>
    %cst_13 = arith.constant dense<0xFF800000> : vector<4x128xf32>
    %22 = vector.multi_reduction <maximumf>, %21, %cst_13 [1] : vector<4x16x128xf32> to vector<4x128xf32>
    %23 = vector.shape_cast %22 : vector<4x128xf32> to vector<4x1x128xf32>
    %24 = vector.broadcast %23 : vector<4x1x128xf32> to vector<4x16x128xf32>
    %25 = arith.subf %21, %24 : vector<4x16x128xf32>
    %26 = math.exp %25 : vector<4x16x128xf32>
    %cst_14 = arith.constant dense<0.000000e+00> : vector<4x128xf32>
    %27 = vector.multi_reduction <add>, %26, %cst_14 [1] : vector<4x16x128xf32> to vector<4x128xf32>
    %28 = math.log %27 : vector<4x128xf32>
    %29 = tpu.iota {dimensions = array<i32: 1>} : vector<4x16x128xi32>
    %c0_15 = arith.constant 0 : index
    %c0_16 = arith.constant 0 : index
    %30 = vector.load %arg5[%c0_15, %c0_16] : memref<4x128xi32, #tpu.memory_space<vmem>>, vector<4x128xi32>
    %31 = vector.shape_cast %30 : vector<4x128xi32> to vector<4x1x128xi32>
    %32 = vector.broadcast %31 : vector<4x1x128xi32> to vector<4x16x128xi32>
    %33 = arith.cmpi eq, %29, %32 : vector<4x16x128xi32>
    %cst_17 = arith.constant 0.000000e+00 : f32
    %34 = vector.broadcast %cst_17 : f32 to vector<4x16x128xf32>
    %35 = arith.select %33, %25, %34 : vector<4x16x128xi1>, vector<4x16x128xf32>
    %cst_18 = arith.constant dense<0.000000e+00> : vector<4x128xf32>
    %36 = vector.multi_reduction <add>, %35, %cst_18 [1] : vector<4x16x128xf32> to vector<4x128xf32>
    %37 = arith.subf %36, %28 : vector<4x128xf32>
    %cst_19 = arith.constant 0.000000e+00 : f32
    %38 = vector.broadcast %cst_19 : f32 to vector<4x128xf32>
    %39 = arith.subf %38, %37 : vector<4x128xf32>
    %40 = arith.mulf %39, %20 : vector<4x128xf32>
    %cst_20 = arith.constant dense<0.000000e+00> : vector<128xf32>
    %41 = vector.multi_reduction <add>, %40, %cst_20 [0] : vector<4x128xf32> to vector<128xf32>
    %42 = vector.shape_cast %41 : vector<128xf32> to vector<1x128xf32>
    %c0_i32 = arith.constant 0 : i32
    %43 = arith.cmpi eq, %arg1, %c0_i32 : i32
    %44 = arith.extui %43 : i1 to i32
    %c0_i32_21 = arith.constant 0 : i32
    %45 = arith.cmpi ne, %44, %c0_i32_21 : i32
    scf.if %45 {
      %cst_34 = arith.constant 0.000000e+00 : f32
      %54 = vector.broadcast %cst_34 : f32 to vector<1x1x128xf32>
      %c0_35 = arith.constant 0 : index
      %c0_36 = arith.constant 0 : index
      %c0_37 = arith.constant 0 : index
      %55 = vector.load %arg8[%c0_35, %c0_36, %c0_37] : memref<1x1x128xf32, #tpu.memory_space<vmem>>, vector<1x1x128xf32>
      tpu.vector_store %arg8[%c0_35, %c0_36, %c0_37], %54 {strides = array<i32>} : memref<1x1x128xf32, #tpu.memory_space<vmem>>, vector<1x1x128xf32>,
      %cst_38 = arith.constant 0.000000e+00 : f32
      %56 = vector.broadcast %cst_38 : f32 to vector<1x1x128xf32>
      %c0_39 = arith.constant 0 : index
      %c0_40 = arith.constant 0 : index
      %c0_41 = arith.constant 0 : index
      %57 = vector.load %arg9[%c0_39, %c0_40, %c0_41] : memref<1x1x128xf32, #tpu.memory_space<vmem>>, vector<1x1x128xf32>
      tpu.vector_store %arg9[%c0_39, %c0_40, %c0_41], %56 {strides = array<i32>} : memref<1x1x128xf32, #tpu.memory_space<vmem>>, vector<1x1x128xf32>,
    } else {
    }
    %c0_22 = arith.constant 0 : index
    %c0_23 = arith.constant 0 : index
    %c0_24 = arith.constant 0 : index
    %46 = vector.load %arg8[%c0_22, %c0_23, %c0_24] : memref<1x1x128xf32, #tpu.memory_space<vmem>>, vector<1x1x128xf32>
    %47 = vector.shape_cast %5 : vector<1x128xf32> to vector<1x1x128xf32>
    %48 = arith.addf %46, %47 : vector<1x1x128xf32>
    %c0_25 = arith.constant 0 : index
    %c0_26 = arith.constant 0 : index
    %c0_27 = arith.constant 0 : index
    %49 = vector.load %arg8[%c0_25, %c0_26, %c0_27] : memref<1x1x128xf32, #tpu.memory_space<vmem>>, vector<1x1x128xf32>
    tpu.vector_store %arg8[%c0_25, %c0_26, %c0_27], %48 {strides = array<i32>} : memref<1x1x128xf32, #tpu.memory_space<vmem>>, vector<1x1x128xf32>,
    %c0_28 = arith.constant 0 : index
    %c0_29 = arith.constant 0 : index
    %c0_30 = arith.constant 0 : index
    %50 = vector.load %arg9[%c0_28, %c0_29, %c0_30] : memref<1x1x128xf32, #tpu.memory_space<vmem>>, vector<1x1x128xf32>
    %51 = vector.shape_cast %42 : vector<1x128xf32> to vector<1x1x128xf32>
    %52 = arith.addf %50, %51 : vector<1x1x128xf32>
    %c0_31 = arith.constant 0 : index
    %c0_32 = arith.constant 0 : index
    %c0_33 = arith.constant 0 : index
    %53 = vector.load %arg9[%c0_31, %c0_32, %c0_33] : memref<1x1x128xf32, #tpu.memory_space<vmem>>, vector<1x1x128xf32>
    tpu.vector_store %arg9[%c0_31, %c0_32, %c0_33], %52 {strides = array<i32>} : memref<1x1x128xf32, #tpu.memory_space<vmem>>, vector<1x1x128xf32>,
    return
  }
  func.func @transform_0(%arg0: i32, %arg1: i32) -> (i32, i32) {
    %c1_i32 = arith.constant 1 : i32
    %0 = arith.muli %arg0, %c1_i32 : i32
    %1 = arith.addi %0, %arg1 : i32
    %c0_i32 = arith.constant 0 : i32
    %c0_i32_0 = arith.constant 0 : i32
    return %c0_i32, %1 : i32, i32
  }
  func.func @transform_1(%arg0: i32, %arg1: i32) -> (i32, i32) {
    %c1_i32 = arith.constant 1 : i32
    %0 = arith.muli %arg0, %c1_i32 : i32
    %1 = arith.addi %0, %arg1 : i32
    %c0_i32 = arith.constant 0 : i32
    %c0_i32_0 = arith.constant 0 : i32
    return %c0_i32, %1 : i32, i32
  }
  func.func @transform_2(%arg0: i32, %arg1: i32) -> (i32, i32, i32) {
    %c1_i32 = arith.constant 1 : i32
    %0 = arith.muli %arg0, %c1_i32 : i32
    %1 = arith.addi %0, %arg1 : i32
    %c0_i32 = arith.constant 0 : i32
    %c0_i32_0 = arith.constant 0 : i32
    %c0_i32_1 = arith.constant 0 : i32
    return %c0_i32, %c0_i32_0, %1 : i32, i32, i32
  }
  func.func @transform_3(%arg0: i32, %arg1: i32) -> (i32, i32) {
    %c1_i32 = arith.constant 1 : i32
    %0 = arith.muli %arg0, %c1_i32 : i32
    %1 = arith.addi %0, %arg1 : i32
    %c0_i32 = arith.constant 0 : i32
    %c0_i32_0 = arith.constant 0 : i32
    return %c0_i32, %1 : i32, i32
  }
  func.func @transform_4(%arg0: i32, %arg1: i32) -> (i32, i32) {
    %c1_i32 = arith.constant 1 : i32
    %0 = arith.muli %arg0, %c1_i32 : i32
    %1 = arith.addi %0, %arg1 : i32
    %c0_i32 = arith.constant 0 : i32
    %c0_i32_0 = arith.constant 0 : i32
    return %c0_i32, %1 : i32, i32
  }
  func.func @transform_5(%arg0: i32, %arg1: i32) -> (i32, i32) {
    %c1_i32 = arith.constant 1 : i32
    %0 = arith.muli %arg0, %c1_i32 : i32
    %1 = arith.addi %0, %arg1 : i32
    %c0_i32 = arith.constant 0 : i32
    %c0_i32_0 = arith.constant 0 : i32
    return %c0_i32, %1 : i32, i32
  }
  func.func @transform_6(%arg0: i32, %arg1: i32) -> (i32, i32, i32) {
    %c0_i32 = arith.constant 0 : i32
    %c0_i32_0 = arith.constant 0 : i32
    %c0_i32_1 = arith.constant 0 : i32
    return %arg0, %c0_i32, %c0_i32_0 : i32, i32, i32
  }
  func.func @transform_7(%arg0: i32, %arg1: i32) -> (i32, i32, i32) {
    %c0_i32 = arith.constant 0 : i32
    %c0_i32_0 = arith.constant 0 : i32
    %c0_i32_1 = arith.constant 0 : i32
    return %arg0, %c0_i32, %c0_i32_0 : i32, i32, i32
  }
}

</mosaic_0001>

<llo_original>
// kernel: routing_loss_forward.1
$region0: #{routing_loss_forward.1}
  #allocation0 [shape = 'u32[]', space=smem, size = 0x4, offset = 0x4, fixed_abs, tag = 'smem constant byte address 0x4 - core index']
  #allocation1 [shape = 'u32[144,128]{1,0:T(1,128)}', space=vmem, size = 0x12000, scoped, tag = 'internal scratch']
  %s0 = inlined_call_operand.vmem [shape: f32[32,128], index: 0, kind: input, shape index: {}]
  %s1 = inlined_call_operand.vmem [shape: f32[32,128], index: 1, kind: input, shape index: {}]
  %s2 = inlined_call_operand.vmem [shape: f32[4,16,128], index: 2, kind: input, shape index: {}]
  %s3 = inlined_call_operand.vmem [shape: s32[4,128], index: 3, kind: input, shape index: {}]
  %s4 = inlined_call_operand.vmem [shape: f32[4,128], index: 4, kind: input, shape index: {}]
  %s5 = inlined_call_operand.vmem [shape: f32[4,128], index: 5, kind: input, shape index: {}]
  %s6 = inlined_call_operand.vmem [shape: f32[1,1,128], index: 6, kind: output, shape index: {0}]
  %s7 = inlined_call_operand.vmem [shape: f32[1,1,128], index: 7, kind: output, shape index: {1}]
  %8 = xla_tuple %s6, %s7
  %s9 = sld [smem:[#allocation0]]
  $region46: #{routing_loss_forward.1} parent=0
    _
  %s11 = ssub.s32 1, %s9
  %s12 = scalar_select 0, %s11, %s9
  // Predicated region
  $region2: #{routing_loss_forward.1} parent=0 // pred_check
    _
  $region3: #{routing_loss_forward.1} parent=0 // pred_check_branch
    %14 = sbr.rel (0) target = $region5
  $region4: #{routing_loss_forward.1} parent=0 // pred_region
    %s15 = sadd.s32 0, 0
    %p16 = scmp.lt.s32.totalorder %s15, 0
    %s17 = scalar_select %p16, %s15, 0
    %s18 = smul.addr %s17, 8
    %s19 = scalar_lea.vmem %s0, %s18
    %s20 = sadd.s32 0, 0
  $region5: #{routing_loss_forward.1} parent=0 // pred_fallthru
    _
  // Predicated region
  $region6: #{routing_loss_forward.1} parent=0 // pred_check
    _
  $region7: #{routing_loss_forward.1} parent=0 // pred_check_branch
    %22 = sbr.rel (0) target = $region9
  $region8: #{routing_loss_forward.1} parent=0 // pred_region
    %s23 = sadd.s32 0, 0
    %p24 = scmp.lt.s32.totalorder %s23, 0
    %s25 = scalar_select %p24, %s23, 0
    %s26 = smul.addr %s25, 8
    %s27 = scalar_lea.vmem %s1, %s26
    %s28 = sadd.s32 0, 0
  $region9: #{routing_loss_forward.1} parent=0 // pred_fallthru
    _
  // Predicated region
  $region10: #{routing_loss_forward.1} parent=0 // pred_check
    _
  $region11: #{routing_loss_forward.1} parent=0 // pred_check_branch
    %30 = sbr.rel (0) target = $region13
  $region12: #{routing_loss_forward.1} parent=0 // pred_region
    %s31 = sadd.s32 0, 0
    %p32 = scmp.lt.s32.totalorder %s31, 0
    %s33 = scalar_select %p32, %s31, 0
    %s34 = smul.addr %s33, 8
    %s35 = scalar_lea.vmem %s2, %s34
    %s36 = sadd.s32 0, 0
  $region13: #{routing_loss_forward.1} parent=0 // pred_fallthru
    _
  // Predicated region
  $region14: #{routing_loss_forward.1} parent=0 // pred_check
    _
  $region15: #{routing_loss_forward.1} parent=0 // pred_check_branch
    %38 = sbr.rel (0) target = $region17
  $region16: #{routing_loss_forward.1} parent=0 // pred_region
    %s39 = sadd.s32 0, 0
    %p40 = scmp.lt.s32.totalorder %s39, 0
    %s41 = scalar_select %p40, %s39, 0
    %s42 = smul.addr %s41, 4
    %s43 = scalar_lea.vmem %s3, %s42
    %s44 = sadd.s32 0, 0
  $region17: #{routing_loss_forward.1} parent=0 // pred_fallthru
    _
  // Predicated region
  $region18: #{routing_loss_forward.1} parent=0 // pred_check
    _
  $region19: #{routing_loss_forward.1} parent=0 // pred_check_branch
    %46 = sbr.rel (0) target = $region21
  $region20: #{routing_loss_forward.1} parent=0 // pred_region
    %s47 = sadd.s32 0, 0
    %p48 = scmp.lt.s32.totalorder %s47, 0
    %s49 = scalar_select %p48, %s47, 0
    %s50 = smul.addr %s49, 4
    %s51 = scalar_lea.vmem %s4, %s50
    %s52 = sadd.s32 0, 0
  $region21: #{routing_loss_forward.1} parent=0 // pred_fallthru
    _
  // Predicated region
  $region22: #{routing_loss_forward.1} parent=0 // pred_check
    _
  $region23: #{routing_loss_forward.1} parent=0 // pred_check_branch
    %54 = sbr.rel (0) target = $region25
  $region24: #{routing_loss_forward.1} parent=0 // pred_region
    %s55 = sadd.s32 0, 0
    %p56 = scmp.lt.s32.totalorder %s55, 0
    %s57 = scalar_select %p56, %s55, 0
    %s58 = smul.addr %s57, 4
    %s59 = scalar_lea.vmem %s5, %s58
    %s60 = sadd.s32 0, 0
  $region25: #{routing_loss_forward.1} parent=0 // pred_fallthru
    _
  %s61 = sadd.s32 0, 0
  %p62 = scmp.lt.s32.totalorder %s61, 0
  %s63 = scalar_select %p62, %s61, 0
  %s64 = smul.addr %s63, 8
  %s65 = scalar_lea.vmem %s0, %s64
  %s66 = sadd.s32 0, 0
  %p67 = scmp.lt.s32.totalorder %s66, 0
  %s68 = scalar_select %p67, %s66, 0
  %s69 = smul.addr %s68, 8
  %s70 = scalar_lea.vmem %s1, %s69
  %s71 = sadd.s32 0, 0
  %p72 = scmp.lt.s32.totalorder %s71, 0
  %s73 = scalar_select %p72, %s71, 0
  %s74 = smul.addr %s73, 8
  %s75 = scalar_lea.vmem %s2, %s74
  %s76 = sadd.s32 0, 0
  %p77 = scmp.lt.s32.totalorder %s76, 0
  %s78 = scalar_select %p77, %s76, 0
  %s79 = smul.addr %s78, 4
  %s80 = scalar_lea.vmem %s3, %s79
  %s81 = sadd.s32 0, 0
  %p82 = scmp.lt.s32.totalorder %s81, 0
  %s83 = scalar_select %p82, %s81, 0
  %s84 = smul.addr %s83, 4
  %s85 = scalar_lea.vmem %s4, %s84
  %s86 = sadd.s32 0, 0
  %p87 = scmp.lt.s32.totalorder %s86, 0
  %s88 = scalar_select %p87, %s86, 0
  %s89 = smul.addr %s88, 4
  %s90 = scalar_lea.vmem %s5, %s89
  %s91 = sadd.s32 0, 0
  %p92 = scmp.lt.s32.totalorder %s91, 0
  %s93 = scalar_select %p92, %s91, 0
  %s94 = smul.addr %s93, 8
  %s95 = scalar_lea.vmem %s0, %s94
  %s96 = sadd.s32 0, 0
  %s97 = sadd.s32 0, 0
  %p98 = scmp.lt.s32.totalorder %s97, 0
  %s99 = scalar_select %p98, %s97, 0
  %s100 = smul.addr %s99, 8
  %s101 = scalar_lea.vmem %s1, %s100
  %s102 = sadd.s32 0, 0
  %s103 = sadd.s32 0, 0
  %p104 = scmp.lt.s32.totalorder %s103, 0
  %s105 = scalar_select %p104, %s103, 0
  %s106 = smul.addr %s105, 8
  %s107 = scalar_lea.vmem %s2, %s106
  %s108 = sadd.s32 0, 0
  %s109 = sadd.s32 0, 0
  %p110 = scmp.lt.s32.totalorder %s109, 0
  %s111 = scalar_select %p110, %s109, 0
  %s112 = smul.addr %s111, 4
  %s113 = scalar_lea.vmem %s3, %s112
  %s114 = sadd.s32 0, 0
  %s115 = sadd.s32 0, 0
  %p116 = scmp.lt.s32.totalorder %s115, 0
  %s117 = scalar_select %p116, %s115, 0
  %s118 = smul.addr %s117, 4
  %s119 = scalar_lea.vmem %s4, %s118
  %s120 = sadd.s32 0, 0
  %s121 = sadd.s32 0, 0
  %p122 = scmp.lt.s32.totalorder %s121, 0
  %s123 = scalar_select %p122, %s121, 0
  %s124 = smul.addr %s123, 4
  %s125 = scalar_lea.vmem %s5, %s124
  %s126 = sadd.s32 0, 0
  %v127 = vld [vmem:[%s95] sm:$0xff]
  %v128 = vld [vmem:[%s95 + $0x8] sm:$0xff]
  %v129 = vld [vmem:[%s95 + $0x10] sm:$0xff]
  %v130 = vld [vmem:[%s95 + $0x18] sm:$0xff]
  %v131 = vld [vmem:[%s101] sm:$0xff]
  %v132 = vld [vmem:[%s101 + $0x8] sm:$0xff]
  %v133 = vld [vmem:[%s101 + $0x10] sm:$0xff]
  %v134 = vld [vmem:[%s101 + $0x18] sm:$0xff]
  %v135 = vsub.f32 %v127, %v131
  %v136 = vsub.f32 %v128, %v132
  %v137 = vsub.f32 %v129, %v133
  %v138 = vsub.f32 %v130, %v134
  %v139 = vmul.f32 %v135, %v135
  %v140 = vmul.f32 %v136, %v136
  %v141 = vmul.f32 %v137, %v137
  %v142 = vmul.f32 %v138, %v138
  %v143 = vadd.f32 %v139, %v140
  %v144 = vadd.f32 %v143, %v141
  %v145 = vadd.f32 %v144, %v142
  %v146 = vrot.slane %v145, 4
  %v147 = vadd.f32 %v145, %v146
  %v148 = vrot.slane %v147, 2
  %v149 = vadd.f32 %v147, %v148
  %v150 = vrot.slane %v149, 1
  %v151 = vadd.f32 %v149, %v150
  %v152 = vsub.f32 0.0, %v151
  %v153 = vld [vmem:[%s119] sm:$0xf]
  %v154 = vmul.f32 %v153, 0.25
  %v155 = vld [vmem:[%s125] sm:$0xf]
  %v156 = vadd.f32 %v154, %v155
  %v157 = vlaneseq
  %v158 = vshrl.u32 %v157, 7
  %v159 = vlaneseq
  %v160 = vand.u32 %v159, 127
  %vm161 = vcmp.ge.s32.totalorder %v160, %v158
  %v162 = vsel %vm161, 1, 0
  %v163 = vcvt.s32.f32 %v162
  %vm164 = vcmask 31744
  %v166 = vsel %vm164, %v163, 0
  %vm168 = vcmask 1043456
  %v170 = vsel %vm168, %v156, 0
  %172 = vmatprep.subr.mxu0 0.0
  %173 = vmatpush1.msra.mxu0 0.0
  %174 = vmatprep.subr.mxu0 0.0
  %175 = vmatpush1.msra.mxu0 0.0
  %176 = vmatprep.subr.mxu0 0.0
  %177 = vmatpush1.msra.mxu0 0.0
  %178 = vmatprep.subr.mxu0 0.0
  %179 = vmatpush1.msra.mxu0 0.0
  %180 = vmatprep.subr.mxu0 0.0
  %181 = vmatpush1.msra.mxu0 0.0
  %182 = vmatprep.subr.mxu0 0.0
  %183 = vmatpush1.msra.mxu0 0.0
  %184 = vmatprep.subr.mxu0 0.0
  %185 = vmatpush1.msra.mxu0 0.0
  %186 = vmatprep.subr.mxu0 0.0
  %187 = vmatpush1.msra.mxu0 0.0
  %188 = vmatprep.subr.mxu0 0.0
  %189 = vmatpush1.msra.mxu0 0.0
  %190 = vmatprep.subr.mxu0 0.0
  %191 = vmatpush1.msra.mxu0 0.0
  %192 = vmatprep.subr.mxu0 0.0
  %193 = vmatpush1.msra.mxu0 0.0
  %194 = vmatprep.subr.mxu0 0.0
  %195 = vmatpush1.msra.mxu0 0.0
  %196 = vmatprep.subr.mxu0 0.0
  %197 = vmatpush1.msra.mxu0 0.0
  %198 = vmatprep.subr.mxu0 0.0
  %199 = vmatpush1.msra.mxu0 0.0
  %200 = vmatprep.subr.mxu0 0.0
  %201 = vmatpush1.msra.mxu0 0.0
  %202 = vmatprep.subr.mxu0 0.0
  %v203 = vand.u32 %v170, 4294901760
  %204 = vmatpush1.msra.mxu0 %v203
  %205 = vmatprep.subr.mxu0 0.0
  %206 = vmatpush2.msra.mxu0 0.0
  %207 = vmatprep.subr.mxu0 0.0
  %208 = vmatpush2.msra.mxu0 0.0
  %209 = vmatprep.subr.mxu0 0.0
  %210 = vmatpush2.msra.mxu0 0.0
  %211 = vmatprep.subr.mxu0 0.0
  %212 = vmatpush2.msra.mxu0 0.0
  %213 = vmatprep.subr.mxu0 0.0
  %214 = vmatpush2.msra.mxu0 0.0
  %215 = vmatprep.subr.mxu0 0.0
  %216 = vmatpush2.msra.mxu0 0.0
  %217 = vmatprep.subr.mxu0 0.0
  %218 = vmatpush2.msra.mxu0 0.0
  %219 = vmatprep.subr.mxu0 0.0
  %220 = vmatpush2.msra.mxu0 0.0
  %221 = vmatprep.subr.mxu0 0.0
  %222 = vmatpush2.msra.mxu0 0.0
  %223 = vmatprep.subr.mxu0 0.0
  %224 = vmatpush2.msra.mxu0 0.0
  %225 = vmatprep.subr.mxu0 0.0
  %226 = vmatpush2.msra.mxu0 0.0
  %227 = vmatprep.subr.mxu0 0.0
  %228 = vmatpush2.msra.mxu0 0.0
  %229 = vmatprep.subr.mxu0 0.0
  %230 = vmatpush2.msra.mxu0 0.0
  %231 = vmatprep.subr.mxu0 0.0
  %232 = vmatpush2.msra.mxu0 0.0
  %233 = vmatprep.subr.mxu0 0.0
  %234 = vmatpush2.msra.mxu0 0.0
  %235 = vmatprep.subr.mxu0 0.0
  %236 = vmatpush2.msra.mxu0 0.0
  %237 = vmatprep.mubr.f32.mxu0 0.0
  %v238 = vand.u32 %v166, 4294901760
  %v239 = vsub.f32 %v166, %v238
  %v240 = vand.u32 %v239, 4294901760
  %v241 = vsub.f32 %v239, %v240
  %v242 = vand.u32 %v241, 4294901760
  %243 = vmatmul.mubr.f32.gmra.mxu0 %v242
  %v244 = vpop.f32.mrf.mxu0
  %v245 = vadd.f32 %v152, %v244
  %v246 = vpop.f32.mrf.mxu0
  %247 = vdwg.mxu0
  %248 = vmatprep.subr.mxu0 0.0
  %249 = vmatpush1.msra.mxu0 0.0
  %250 = vmatprep.subr.mxu0 0.0
  %251 = vmatpush1.msra.mxu0 0.0
  %252 = vmatprep.subr.mxu0 0.0
  %253 = vmatpush1.msra.mxu0 0.0
  %254 = vmatprep.subr.mxu0 0.0
  %255 = vmatpush1.msra.mxu0 0.0
  %256 = vmatprep.subr.mxu0 0.0
  %257 = vmatpush1.msra.mxu0 0.0
  %258 = vmatprep.subr.mxu0 0.0
  %259 = vmatpush1.msra.mxu0 0.0
  %260 = vmatprep.subr.mxu0 0.0
  %261 = vmatpush1.msra.mxu0 0.0
  %262 = vmatprep.subr.mxu0 0.0
  %263 = vmatpush1.msra.mxu0 0.0
  %264 = vmatprep.subr.mxu0 0.0
  %265 = vmatpush1.msra.mxu0 0.0
  %266 = vmatprep.subr.mxu0 0.0
  %267 = vmatpush1.msra.mxu0 0.0
  %268 = vmatprep.subr.mxu0 0.0
  %269 = vmatpush1.msra.mxu0 0.0
  %270 = vmatprep.subr.mxu0 0.0
  %271 = vmatpush1.msra.mxu0 0.0
  %272 = vmatprep.subr.mxu0 0.0
  %273 = vmatpush1.msra.mxu0 0.0
  %274 = vmatprep.subr.mxu0 0.0
  %275 = vmatpush1.msra.mxu0 0.0
  %276 = vmatprep.subr.mxu0 0.0
  %277 = vmatpush1.msra.mxu0 0.0
  %278 = vmatprep.subr.mxu0 0.0
  %v279 = vand.u32 %v170, 4294901760
  %v280 = vsub.f32 %v170, %v279
  %v281 = vand.u32 %v280, 4294901760
  %v282 = vsub.f32 %v280, %v281
  %v283 = vand.u32 %v282, 4294901760
  %284 = vmatpush1.msra.mxu0 %v283
  %285 = vmatprep.subr.mxu0 0.0
  %286 = vmatpush2.msra.mxu0 0.0
  %287 = vmatprep.subr.mxu0 0.0
  %288 = vmatpush2.msra.mxu0 0.0
  %289 = vmatprep.subr.mxu0 0.0
  %290 = vmatpush2.msra.mxu0 0.0
  %291 = vmatprep.subr.mxu0 0.0
  %292 = vmatpush2.msra.mxu0 0.0
  %293 = vmatprep.subr.mxu0 0.0
  %294 = vmatpush2.msra.mxu0 0.0
  %295 = vmatprep.subr.mxu0 0.0
  %296 = vmatpush2.msra.mxu0 0.0
  %297 = vmatprep.subr.mxu0 0.0
  %298 = vmatpush2.msra.mxu0 0.0
  %299 = vmatprep.subr.mxu0 0.0
  %300 = vmatpush2.msra.mxu0 0.0
  %301 = vmatprep.subr.mxu0 0.0
  %302 = vmatpush2.msra.mxu0 0.0
  %303 = vmatprep.subr.mxu0 0.0
  %304 = vmatpush2.msra.mxu0 0.0
  %305 = vmatprep.subr.mxu0 0.0
  %306 = vmatpush2.msra.mxu0 0.0
  %307 = vmatprep.subr.mxu0 0.0
  %308 = vmatpush2.msra.mxu0 0.0
  %309 = vmatprep.subr.mxu0 0.0
  %310 = vmatpush2.msra.mxu0 0.0
  %311 = vmatprep.subr.mxu0 0.0
  %312 = vmatpush2.msra.mxu0 0.0
  %313 = vmatprep.subr.mxu0 0.0
  %314 = vmatpush2.msra.mxu0 0.0
  %315 = vmatprep.subr.mxu0 0.0
  %316 = vmatpush2.msra.mxu0 0.0
  %317 = vmatprep.mubr.f32.mxu0 0.0
  %v318 = vand.u32 %v166, 4294901760
  %319 = vmatmul.mubr.f32.gmra.mxu0 %v318
  %v320 = vpop.f32.mrf.mxu0
  %v321 = vadd.f32 %v245, %v320
  %v322 = vpop.f32.mrf.mxu0
  %323 = vdwg.mxu0
  %324 = vmatprep.subr.mxu0 0.0
  %325 = vmatpush1.msra.mxu0 0.0
  %326 = vmatprep.subr.mxu0 0.0
  %327 = vmatpush1.msra.mxu0 0.0
  %328 = vmatprep.subr.mxu0 0.0
  %329 = vmatpush1.msra.mxu0 0.0
  %330 = vmatprep.subr.mxu0 0.0
  %331 = vmatpush1.msra.mxu0 0.0
  %332 = vmatprep.subr.mxu0 0.0
  %333 = vmatpush1.msra.mxu0 0.0
  %334 = vmatprep.subr.mxu0 0.0
  %335 = vmatpush1.msra.mxu0 0.0
  %336 = vmatprep.subr.mxu0 0.0
  %337 = vmatpush1.msra.mxu0 0.0
  %338 = vmatprep.subr.mxu0 0.0
  %339 = vmatpush1.msra.mxu0 0.0
  %340 = vmatprep.subr.mxu0 0.0
  %341 = vmatpush1.msra.mxu0 0.0
  %342 = vmatprep.subr.mxu0 0.0
  %343 = vmatpush1.msra.mxu0 0.0
  %344 = vmatprep.subr.mxu0 0.0
  %345 = vmatpush1.msra.mxu0 0.0
  %346 = vmatprep.subr.mxu0 0.0
  %347 = vmatpush1.msra.mxu0 0.0
  %348 = vmatprep.subr.mxu0 0.0
  %349 = vmatpush1.msra.mxu0 0.0
  %350 = vmatprep.subr.mxu0 0.0
  %351 = vmatpush1.msra.mxu0 0.0
  %352 = vmatprep.subr.mxu0 0.0
  %353 = vmatpush1.msra.mxu0 0.0
  %354 = vmatprep.subr.mxu0 0.0
  %v355 = vand.u32 %v170, 4294901760
  %v356 = vsub.f32 %v170, %v355
  %357 = vmatpush1.msra.mxu0 %v356
  %358 = vmatprep.subr.mxu0 0.0
  %359 = vmatpush2.msra.mxu0 0.0
  %360 = vmatprep.subr.mxu0 0.0
  %361 = vmatpush2.msra.mxu0 0.0
  %362 = vmatprep.subr.mxu0 0.0
  %363 = vmatpush2.msra.mxu0 0.0
  %364 = vmatprep.subr.mxu0 0.0
  %365 = vmatpush2.msra.mxu0 0.0
  %366 = vmatprep.subr.mxu0 0.0
  %367 = vmatpush2.msra.mxu0 0.0
  %368 = vmatprep.subr.mxu0 0.0
  %369 = vmatpush2.msra.mxu0 0.0
  %370 = vmatprep.subr.mxu0 0.0
  %371 = vmatpush2.msra.mxu0 0.0
  %372 = vmatprep.subr.mxu0 0.0
  %373 = vmatpush2.msra.mxu0 0.0
  %374 = vmatprep.subr.mxu0 0.0
  %375 = vmatpush2.msra.mxu0 0.0
  %376 = vmatprep.subr.mxu0 0.0
  %377 = vmatpush2.msra.mxu0 0.0
  %378 = vmatprep.subr.mxu0 0.0
  %379 = vmatpush2.msra.mxu0 0.0
  %380 = vmatprep.subr.mxu0 0.0
  %381 = vmatpush2.msra.mxu0 0.0
  %382 = vmatprep.subr.mxu0 0.0
  %383 = vmatpush2.msra.mxu0 0.0
  %384 = vmatprep.subr.mxu0 0.0
  %385 = vmatpush2.msra.mxu0 0.0
  %386 = vmatprep.subr.mxu0 0.0
  %387 = vmatpush2.msra.mxu0 0.0
  %388 = vmatprep.subr.mxu0 0.0
  %389 = vmatpush2.msra.mxu0 0.0
  %390 = vmatprep.mubr.f32.mxu0 0.0
  %v391 = vand.u32 %v166, 4294901760
  %v392 = vsub.f32 %v166, %v391
  %393 = vmatmul.mubr.f32.gmra.mxu0 %v392
  %v394 = vpop.f32.mrf.mxu0
  %v395 = vadd.f32 %v321, %v394
  %v396 = vpop.f32.mrf.mxu0
  %397 = vdwg.mxu0
  %398 = vmatprep.subr.mxu0 0.0
  %399 = vmatpush1.msra.mxu0 0.0
  %400 = vmatprep.subr.mxu0 0.0
  %401 = vmatpush1.msra.mxu0 0.0
  %402 = vmatprep.subr.mxu0 0.0
  %403 = vmatpush1.msra.mxu0 0.0
  %404 = vmatprep.subr.mxu0 0.0
  %405 = vmatpush1.msra.mxu0 0.0
  %406 = vmatprep.subr.mxu0 0.0
  %407 = vmatpush1.msra.mxu0 0.0
  %408 = vmatprep.subr.mxu0 0.0
  %409 = vmatpush1.msra.mxu0 0.0
  %410 = vmatprep.subr.mxu0 0.0
  %411 = vmatpush1.msra.mxu0 0.0
  %412 = vmatprep.subr.mxu0 0.0
  %413 = vmatpush1.msra.mxu0 0.0
  %414 = vmatprep.subr.mxu0 0.0
  %415 = vmatpush1.msra.mxu0 0.0
  %416 = vmatprep.subr.mxu0 0.0
  %417 = vmatpush1.msra.mxu0 0.0
  %418 = vmatprep.subr.mxu0 0.0
  %419 = vmatpush1.msra.mxu0 0.0
  %420 = vmatprep.subr.mxu0 0.0
  %421 = vmatpush1.msra.mxu0 0.0
  %422 = vmatprep.subr.mxu0 0.0
  %423 = vmatpush1.msra.mxu0 0.0
  %424 = vmatprep.subr.mxu0 0.0
  %425 = vmatpush1.msra.mxu0 0.0
  %426 = vmatprep.subr.mxu0 0.0
  %427 = vmatpush1.msra.mxu0 0.0
  %428 = vmatprep.subr.mxu0 0.0
  %v429 = vand.u32 %v170, 4294901760
  %430 = vmatpush1.msra.mxu0 %v429
  %431 = vmatprep.subr.mxu0 0.0
  %432 = vmatpush2.msra.mxu0 0.0
  %433 = vmatprep.subr.mxu0 0.0
  %434 = vmatpush2.msra.mxu0 0.0
  %435 = vmatprep.subr.mxu0 0.0
  %436 = vmatpush2.msra.mxu0 0.0
  %437 = vmatprep.subr.mxu0 0.0
  %438 = vmatpush2.msra.mxu0 0.0
  %439 = vmatprep.subr.mxu0 0.0
  %440 = vmatpush2.msra.mxu0 0.0
  %441 = vmatprep.subr.mxu0 0.0
  %442 = vmatpush2.msra.mxu0 0.0
  %443 = vmatprep.subr.mxu0 0.0
  %444 = vmatpush2.msra.mxu0 0.0
  %445 = vmatprep.subr.mxu0 0.0
  %446 = vmatpush2.msra.mxu0 0.0
  %447 = vmatprep.subr.mxu0 0.0
  %448 = vmatpush2.msra.mxu0 0.0
  %449 = vmatprep.subr.mxu0 0.0
  %450 = vmatpush2.msra.mxu0 0.0
  %451 = vmatprep.subr.mxu0 0.0
  %452 = vmatpush2.msra.mxu0 0.0
  %453 = vmatprep.subr.mxu0 0.0
  %454 = vmatpush2.msra.mxu0 0.0
  %455 = vmatprep.subr.mxu0 0.0
  %456 = vmatpush2.msra.mxu0 0.0
  %457 = vmatprep.subr.mxu0 0.0
  %458 = vmatpush2.msra.mxu0 0.0
  %459 = vmatprep.subr.mxu0 0.0
  %460 = vmatpush2.msra.mxu0 0.0
  %461 = vmatprep.subr.mxu0 0.0
  %462 = vmatpush2.msra.mxu0 0.0
  %463 = vmatprep.mubr.f32.mxu0 0.0
  %v464 = vand.u32 %v166, 4294901760
  %v465 = vsub.f32 %v166, %v464
  %v466 = vand.u32 %v465, 4294901760
  %467 = vmatmul.mubr.f32.gmra.mxu0 %v466
  %v468 = vpop.f32.mrf.mxu0
  %v469 = vadd.f32 %v395, %v468
  %v470 = vpop.f32.mrf.mxu0
  %471 = vdwg.mxu0
  %472 = vmatprep.subr.mxu0 0.0
  %473 = vmatpush1.msra.mxu0 0.0
  %474 = vmatprep.subr.mxu0 0.0
  %475 = vmatpush1.msra.mxu0 0.0
  %476 = vmatprep.subr.mxu0 0.0
  %477 = vmatpush1.msra.mxu0 0.0
  %478 = vmatprep.subr.mxu0 0.0
  %479 = vmatpush1.msra.mxu0 0.0
  %480 = vmatprep.subr.mxu0 0.0
  %481 = vmatpush1.msra.mxu0 0.0
  %482 = vmatprep.subr.mxu0 0.0
  %483 = vmatpush1.msra.mxu0 0.0
  %484 = vmatprep.subr.mxu0 0.0
  %485 = vmatpush1.msra.mxu0 0.0
  %486 = vmatprep.subr.mxu0 0.0
  %487 = vmatpush1.msra.mxu0 0.0
  %488 = vmatprep.subr.mxu0 0.0
  %489 = vmatpush1.msra.mxu0 0.0
  %490 = vmatprep.subr.mxu0 0.0
  %491 = vmatpush1.msra.mxu0 0.0
  %492 = vmatprep.subr.mxu0 0.0
  %493 = vmatpush1.msra.mxu0 0.0
  %494 = vmatprep.subr.mxu0 0.0
  %495 = vmatpush1.msra.mxu0 0.0
  %496 = vmatprep.subr.mxu0 0.0
  %497 = vmatpush1.msra.mxu0 0.0
  %498 = vmatprep.subr.mxu0 0.0
  %499 = vmatpush1.msra.mxu0 0.0
  %500 = vmatprep.subr.mxu0 0.0
  %501 = vmatpush1.msra.mxu0 0.0
  %502 = vmatprep.subr.mxu0 0.0
  %v503 = vand.u32 %v170, 4294901760
  %v504 = vsub.f32 %v170, %v503
  %v505 = vand.u32 %v504, 4294901760
  %506 = vmatpush1.msra.mxu0 %v505
  %507 = vmatprep.subr.mxu0 0.0
  %508 = vmatpush2.msra.mxu0 0.0
  %509 = vmatprep.subr.mxu0 0.0
  %510 = vmatpush2.msra.mxu0 0.0
  %511 = vmatprep.subr.mxu0 0.0
  %512 = vmatpush2.msra.mxu0 0.0
  %513 = vmatprep.subr.mxu0 0.0
  %514 = vmatpush2.msra.mxu0 0.0
  %515 = vmatprep.subr.mxu0 0.0
  %516 = vmatpush2.msra.mxu0 0.0
  %517 = vmatprep.subr.mxu0 0.0
  %518 = vmatpush2.msra.mxu0 0.0
  %519 = vmatprep.subr.mxu0 0.0
  %520 = vmatpush2.msra.mxu0 0.0
  %521 = vmatprep.subr.mxu0 0.0
  %522 = vmatpush2.msra.mxu0 0.0
  %523 = vmatprep.subr.mxu0 0.0
  %524 = vmatpush2.msra.mxu0 0.0
  %525 = vmatprep.subr.mxu0 0.0
  %526 = vmatpush2.msra.mxu0 0.0
  %527 = vmatprep.subr.mxu0 0.0
  %528 = vmatpush2.msra.mxu0 0.0
  %529 = vmatprep.subr.mxu0 0.0
  %530 = vmatpush2.msra.mxu0 0.0
  %531 = vmatprep.subr.mxu0 0.0
  %532 = vmatpush2.msra.mxu0 0.0
  %533 = vmatprep.subr.mxu0 0.0
  %534 = vmatpush2.msra.mxu0 0.0
  %535 = vmatprep.subr.mxu0 0.0
  %536 = vmatpush2.msra.mxu0 0.0
  %537 = vmatprep.subr.mxu0 0.0
  %538 = vmatpush2.msra.mxu0 0.0
  %539 = vmatprep.mubr.f32.mxu0 0.0
  %v540 = vand.u32 %v166, 4294901760
  %541 = vmatmul.mubr.f32.gmra.mxu0 %v540
  %v542 = vpop.f32.mrf.mxu0
  %v543 = vadd.f32 %v469, %v542
  %v544 = vpop.f32.mrf.mxu0
  %545 = vdwg.mxu0
  %546 = vmatprep.subr.mxu0 0.0
  %547 = vmatpush1.msra.mxu0 0.0
  %548 = vmatprep.subr.mxu0 0.0
  %549 = vmatpush1.msra.mxu0 0.0
  %550 = vmatprep.subr.mxu0 0.0
  %551 = vmatpush1.msra.mxu0 0.0
  %552 = vmatprep.subr.mxu0 0.0
  %553 = vmatpush1.msra.mxu0 0.0
  %554 = vmatprep.subr.mxu0 0.0
  %555 = vmatpush1.msra.mxu0 0.0
  %556 = vmatprep.subr.mxu0 0.0
  %557 = vmatpush1.msra.mxu0 0.0
  %558 = vmatprep.subr.mxu0 0.0
  %559 = vmatpush1.msra.mxu0 0.0
  %560 = vmatprep.subr.mxu0 0.0
  %561 = vmatpush1.msra.mxu0 0.0
  %562 = vmatprep.subr.mxu0 0.0
  %563 = vmatpush1.msra.mxu0 0.0
  %564 = vmatprep.subr.mxu0 0.0
  %565 = vmatpush1.msra.mxu0 0.0
  %566 = vmatprep.subr.mxu0 0.0
  %567 = vmatpush1.msra.mxu0 0.0
  %568 = vmatprep.subr.mxu0 0.0
  %569 = vmatpush1.msra.mxu0 0.0
  %570 = vmatprep.subr.mxu0 0.0
  %571 = vmatpush1.msra.mxu0 0.0
  %572 = vmatprep.subr.mxu0 0.0
  %573 = vmatpush1.msra.mxu0 0.0
  %574 = vmatprep.subr.mxu0 0.0
  %575 = vmatpush1.msra.mxu0 0.0
  %576 = vmatprep.subr.mxu0 0.0
  %v577 = vand.u32 %v170, 4294901760
  %578 = vmatpush1.msra.mxu0 %v577
  %579 = vmatprep.subr.mxu0 0.0
  %580 = vmatpush2.msra.mxu0 0.0
  %581 = vmatprep.subr.mxu0 0.0
  %582 = vmatpush2.msra.mxu0 0.0
  %583 = vmatprep.subr.mxu0 0.0
  %584 = vmatpush2.msra.mxu0 0.0
  %585 = vmatprep.subr.mxu0 0.0
  %586 = vmatpush2.msra.mxu0 0.0
  %587 = vmatprep.subr.mxu0 0.0
  %588 = vmatpush2.msra.mxu0 0.0
  %589 = vmatprep.subr.mxu0 0.0
  %590 = vmatpush2.msra.mxu0 0.0
  %591 = vmatprep.subr.mxu0 0.0
  %592 = vmatpush2.msra.mxu0 0.0
  %593 = vmatprep.subr.mxu0 0.0
  %594 = vmatpush2.msra.mxu0 0.0
  %595 = vmatprep.subr.mxu0 0.0
  %596 = vmatpush2.msra.mxu0 0.0
  %597 = vmatprep.subr.mxu0 0.0
  %598 = vmatpush2.msra.mxu0 0.0
  %599 = vmatprep.subr.mxu0 0.0
  %600 = vmatpush2.msra.mxu0 0.0
  %601 = vmatprep.subr.mxu0 0.0
  %602 = vmatpush2.msra.mxu0 0.0
  %603 = vmatprep.subr.mxu0 0.0
  %604 = vmatpush2.msra.mxu0 0.0
  %605 = vmatprep.subr.mxu0 0.0
  %606 = vmatpush2.msra.mxu0 0.0
  %607 = vmatprep.subr.mxu0 0.0
  %608 = vmatpush2.msra.mxu0 0.0
  %609 = vmatprep.subr.mxu0 0.0
  %610 = vmatpush2.msra.mxu0 0.0
  %611 = vmatprep.mubr.f32.mxu0 0.0
  %v612 = vand.u32 %v166, 4294901760
  %613 = vmatmul.mubr.f32.gmra.mxu0 %v612
  %v614 = vpop.f32.mrf.mxu0
  %v615 = vadd.f32 %v543, %v614
  %v616 = vpop.f32.mrf.mxu0
  %617 = vdwg.mxu0
  %v618 = vld [vmem:[%s107] sm:$0xff]
  %v619 = vld [vmem:[%s107 + $0x8] sm:$0xff]
  %v620 = vld [vmem:[%s107 + $0x10] sm:$0xff]
  %v621 = vld [vmem:[%s107 + $0x18] sm:$0xff]
  %v622 = vld [vmem:[%s107 + $0x20] sm:$0xff]
  %v623 = vld [vmem:[%s107 + $0x28] sm:$0xff]
  %v624 = vld [vmem:[%s107 + $0x30] sm:$0xff]
  %v625 = vld [vmem:[%s107 + $0x38] sm:$0xff]
  %v626 = vmax.f32 %v618, %v619
  %v627 = vrot.slane %v626, 4
  %v628 = vmax.f32 %v626, %v627
  %v629 = vrot.slane %v628, 2
  %v630 = vmax.f32 %v628, %v629
  %v631 = vrot.slane %v630, 1
  %v632 = vmax.f32 %v630, %v631
  %v633 = vmax.f32 %v620, %v621
  %v634 = vrot.slane %v633, 4
  %v635 = vmax.f32 %v633, %v634
  %v636 = vrot.slane %v635, 2
  %v637 = vmax.f32 %v635, %v636
  %v638 = vrot.slane %v637, 1
  %v639 = vmax.f32 %v637, %v638
  %v640 = vmax.f32 %v622, %v623
  %v641 = vrot.slane %v640, 4
  %v642 = vmax.f32 %v640, %v641
  %v643 = vrot.slane %v642, 2
  %v644 = vmax.f32 %v642, %v643
  %v645 = vrot.slane %v644, 1
  %v646 = vmax.f32 %v644, %v645
  %v647 = vmax.f32 %v624, %v625
  %v648 = vrot.slane %v647, 4
  %v649 = vmax.f32 %v647, %v648
  %v650 = vrot.slane %v649, 2
  %v651 = vmax.f32 %v649, %v650
  %v652 = vrot.slane %v651, 1
  %v653 = vmax.f32 %v651, %v652
  %v654 = vsub.f32 %v618, %v632
  %v655 = vsub.f32 %v619, %v632
  %v656 = vsub.f32 %v620, %v639
  %v657 = vsub.f32 %v621, %v639
  %v658 = vsub.f32 %v622, %v646
  %v659 = vsub.f32 %v623, %v646
  %v660 = vsub.f32 %v624, %v653
  %v661 = vsub.f32 %v625, %v653
  %v662 = vmul.f32 %v654, 1.442695
  %v663 = vpow.pop %v662
  %v664 = vmul.f32 %v655, 1.442695
  %v665 = vpow.pop %v664
  %v666 = vmul.f32 %v656, 1.442695
  %v667 = vpow.pop %v666
  %v668 = vmul.f32 %v657, 1.442695
  %v669 = vpow.pop %v668
  %v670 = vmul.f32 %v658, 1.442695
  %v671 = vpow.pop %v670
  %v672 = vmul.f32 %v659, 1.442695
  %v673 = vpow.pop %v672
  %v674 = vmul.f32 %v660, 1.442695
  %v675 = vpow.pop %v674
  %v676 = vmul.f32 %v661, 1.442695
  %v677 = vpow.pop %v676
  %v678 = vadd.f32 %v663, %v665
  %v679 = vrot.slane %v678, 4
  %v680 = vadd.f32 %v678, %v679
  %v681 = vrot.slane %v680, 2
  %v682 = vadd.f32 %v680, %v681
  %v683 = vrot.slane %v682, 1
  %v684 = vadd.f32 %v682, %v683
  %v685 = vadd.f32 %v667, %v669
  %v686 = vrot.slane %v685, 4
  %v687 = vadd.f32 %v685, %v686
  %v688 = vrot.slane %v687, 2
  %v689 = vadd.f32 %v687, %v688
  %v690 = vrot.slane %v689, 1
  %v691 = vadd.f32 %v689, %v690
  %v692 = vadd.f32 %v671, %v673
  %v693 = vrot.slane %v692, 4
  %v694 = vadd.f32 %v692, %v693
  %v695 = vrot.slane %v694, 2
  %v696 = vadd.f32 %v694, %v695
  %v697 = vrot.slane %v696, 1
  %v698 = vadd.f32 %v696, %v697
  %v699 = vadd.f32 %v675, %v677
  %v700 = vrot.slane %v699, 4
  %v701 = vadd.f32 %v699, %v700
  %v702 = vrot.slane %v701, 2
  %v703 = vadd.f32 %v701, %v702
  %v704 = vrot.slane %v703, 1
  %v705 = vadd.f32 %v703, %v704
  %v706 = vlog2.pop %v684
  %v707 = vmul.f32 %v706, 0.6931472
  %v708 = vlog2.pop %v691
  %v709 = vmul.f32 %v708, 0.6931472
  %v710 = vlog2.pop %v698
  %v711 = vmul.f32 %v710, 0.6931472
  %v712 = vlog2.pop %v705
  %v713 = vmul.f32 %v712, 0.6931472
  %v714 = vadd.s32 %v158, 8
  %v715 = vld [vmem:[%s113] sm:$0xf]
  %v717 = vunpack.c.l.s4 1966171168
  %v718 = vunpack.c.0.s8 %v717
  %v719 = vlaneseq
  %v720 = vshrl.u32 %v719, 7
  %v721 = vsub.s32 %v718, %v720
  %v722 = vrot.slane %v715, %v721
  %v723 = vcombine.high %v722, %v722
  %v725 = vunpack.c.l.s4 1966171168
  %v726 = vunpack.c.0.s8 %v725
  %v727 = vlaneseq
  %v728 = vshrl.u32 %v727, 7
  %v729 = vsub.s32 %v726, %v728
  %v730 = vrot.slane %v722, %v729
  %v732 = vunpack.c.l.s4 1966171168
  %v733 = vunpack.c.0.s8 %v732
  %v734 = vlaneseq
  %v735 = vshrl.u32 %v734, 7
  %v736 = vsub.s32 %v733, %v735
  %v737 = vrot.slane %v723, %v736
  %v738 = vcombine.high %v730, %v730
  %v739 = vcombine.high %v737, %v737
  %v740 = vlaneseq
  %v741 = vshrl.u32 %v740, 7
  %v742 = vsub.s32 0, %v741
  %v743 = vrot.slane %v730, %v742
  %v744 = vlaneseq
  %v745 = vshrl.u32 %v744, 7
  %v746 = vsub.s32 0, %v745
  %v747 = vrot.slane %v737, %v746
  %v748 = vlaneseq
  %v749 = vshrl.u32 %v748, 7
  %v750 = vsub.s32 0, %v749
  %v751 = vrot.slane %v738, %v750
  %v752 = vlaneseq
  %v753 = vshrl.u32 %v752, 7
  %v754 = vsub.s32 0, %v753
  %v755 = vrot.slane %v739, %v754
  %vm756 = vcmp.eq.s32.totalorder %v158, %v743
  %vm757 = vcmp.eq.s32.totalorder %v714, %v743
  %vm758 = vcmp.eq.s32.totalorder %v158, %v747
  %vm759 = vcmp.eq.s32.totalorder %v714, %v747
  %vm760 = vcmp.eq.s32.totalorder %v158, %v751
  %vm761 = vcmp.eq.s32.totalorder %v714, %v751
  %vm762 = vcmp.eq.s32.totalorder %v158, %v755
  %vm763 = vcmp.eq.s32.totalorder %v714, %v755
  %v764 = vsel %vm756, %v654, 0.0
  %v765 = vsel %vm757, %v655, 0.0
  %v766 = vsel %vm758, %v656, 0.0
  %v767 = vsel %vm759, %v657, 0.0
  %v768 = vsel %vm760, %v658, 0.0
  %v769 = vsel %vm761, %v659, 0.0
  %v770 = vsel %vm762, %v660, 0.0
  %v771 = vsel %vm763, %v661, 0.0
  %v772 = vadd.f32 %v764, %v765
  %v773 = vrot.slane %v772, 4
  %v774 = vadd.f32 %v772, %v773
  %v775 = vrot.slane %v774, 2
  %v776 = vadd.f32 %v774, %v775
  %v777 = vrot.slane %v776, 1
  %v778 = vadd.f32 %v776, %v777
  %v779 = vadd.f32 %v766, %v767
  %v780 = vrot.slane %v779, 4
  %v781 = vadd.f32 %v779, %v780
  %v782 = vrot.slane %v781, 2
  %v783 = vadd.f32 %v781, %v782
  %v784 = vrot.slane %v783, 1
  %v785 = vadd.f32 %v783, %v784
  %v786 = vadd.f32 %v768, %v769
  %v787 = vrot.slane %v786, 4
  %v788 = vadd.f32 %v786, %v787
  %v789 = vrot.slane %v788, 2
  %v790 = vadd.f32 %v788, %v789
  %v791 = vrot.slane %v790, 1
  %v792 = vadd.f32 %v790, %v791
  %v793 = vadd.f32 %v770, %v771
  %v794 = vrot.slane %v793, 4
  %v795 = vadd.f32 %v793, %v794
  %v796 = vrot.slane %v795, 2
  %v797 = vadd.f32 %v795, %v796
  %v798 = vrot.slane %v797, 1
  %v799 = vadd.f32 %v797, %v798
  %v800 = vsub.f32 %v778, %v707
  %v801 = vsub.f32 %v785, %v709
  %v802 = vsub.f32 %v792, %v711
  %v803 = vsub.f32 %v799, %v713
  %v804 = vsub.f32 0.0, %v800
  %v805 = vsub.f32 0.0, %v801
  %v806 = vsub.f32 0.0, %v802
  %v807 = vsub.f32 0.0, %v803
  %v809 = vrot.slane %v615, 1
  %v810 = vrot.slane %v615, 2
  %v811 = vrot.slane %v615, 3
  %v816 = vmul.f32 %v804, %v615
  %v817 = vmul.f32 %v805, %v809
  %v818 = vmul.f32 %v806, %v810
  %v819 = vmul.f32 %v807, %v811
  %v824 = vrot.slane %v817, 7
  %vm825 = vcmask 1041409
  %v826 = vsel %vm825, %v824, %v816
  %v827 = vrot.slane %v818, 6
  %vm828 = vcmask 1042434
  %v829 = vsel %vm828, %v827, %v826
  %v830 = vrot.slane %v819, 5
  %vm831 = vcmask 1043459
  %v832 = vsel %vm831, %v830, %v829
  %v834 = vsel %vm168, %v832, 0.0
  %v835 = vrot.slane %v834, 4
  %v836 = vadd.f32 %v834, %v835
  %v837 = vrot.slane %v836, 2
  %v838 = vadd.f32 %v836, %v837
  %v839 = vrot.slane %v838, 1
  %v840 = vadd.f32 %v838, %v839
  %p841 = scmp.eq.s32.totalorder 0, 0
  // Predicated region
  $region26: #{routing_loss_forward.1} parent=0 // pred_check
    %p842 = pneg %p841
  $region27: #{routing_loss_forward.1} parent=0 // pred_check_branch
    %844 = sbr.rel (%p842) target = $region29
  $region28: #{routing_loss_forward.1} parent=0 // pred_region
    %845 = vst [vmem:[%s6] sm:$0x1] 0.0
    %846 = vst [vmem:[%s7] sm:$0x1] 0.0
  $region29: #{routing_loss_forward.1} parent=0 // pred_fallthru
    _
  %v847 = vld [vmem:[%s6] sm:$0x1]
  %v848 = vadd.f32 %v847, %v151
  %849 = vst [vmem:[%s6] sm:$0x1] %v848
  %v850 = vld [vmem:[%s7] sm:$0x1]
  %v851 = vadd.f32 %v850, %v840
  %852 = vst [vmem:[%s7] sm:$0x1] %v851
  // Predicated region
  $region30: #{routing_loss_forward.1} parent=0 // pred_check
    _
  $region31: #{routing_loss_forward.1} parent=0 // pred_check_branch
    %854 = sbr.rel (0) target = $region33
  $region32: #{routing_loss_forward.1} parent=0 // pred_region
    _
  $region33: #{routing_loss_forward.1} parent=0 // pred_fallthru
    _
  // Predicated region
  $region34: #{routing_loss_forward.1} parent=0 // pred_check
    _
  $region35: #{routing_loss_forward.1} parent=0 // pred_check_branch
    %856 = sbr.rel (0) target = $region37
  $region36: #{routing_loss_forward.1} parent=0 // pred_region
    _
  $region37: #{routing_loss_forward.1} parent=0 // pred_fallthru
    _
  // Predicated region
  $region38: #{routing_loss_forward.1} parent=0 // pred_check
    _
  $region39: #{routing_loss_forward.1} parent=0 // pred_check_branch
    %858 = sbr.rel (0) target = $region41
  $region40: #{routing_loss_forward.1} parent=0 // pred_region
    _
  $region41: #{routing_loss_forward.1} parent=0 // pred_fallthru
    _
  // Predicated region
  $region42: #{routing_loss_forward.1} parent=0 // pred_check
    _
  $region43: #{routing_loss_forward.1} parent=0 // pred_check_branch
    %860 = sbr.rel (0) target = $region45
  $region44: #{routing_loss_forward.1} parent=0 // pred_region
    _
  $region45: #{routing_loss_forward.1} parent=0 // pred_fallthru
    _

</llo_original>
